<compile_context>
chip_gen: v5e
topology: v5e:2x2
jax: 0.10.0
libtpu: 0.0.40
codegen_flags: <defaults>
</compile_context>

<pallas_src>
import jax
import jax.numpy as jnp
from jax.experimental import pallas as pl
from jax.experimental.pallas import tpu as pltpu


def _cdiv(a, b):
    return -(-a // b)


def _round_up(x, m):
    return (x + m - 1) // m * m


def _time2vec_kernel(tau_ref, p_ref, out_ref):
    # tau_ref: (TILE_P, G) packed tau rows
    # p_ref  : (rows_pad, L) rows = [Wblk (G rows), b_row, W_row, mask_row, pad...]
    # out_ref: (TILE_P, L) with L = G*E (multiple of 128 in the lane-dense path)
    t = tau_ref[...]                              # (TILE_P, G)
    G = t.shape[1]
    b_row = p_ref[G:G + 1, :]                     # (1, L)
    W_row = p_ref[G + 1:G + 2, :]                 # (1, L)
    mask = p_ref[G + 2:G + 3, :]                  # (1, L): 1.0 periodic, 0.0 aperiodic

    if G == 1:
        # Fallback (E does not divide 128): plain broadcast affine on the VPU.
        lin = t * p_ref[0:1, :] + b_row           # (TILE_P, L)
    else:
        # Lane broadcast + per-channel weight in one (otherwise idle) MXU matmul.
        Wblk = p_ref[0:G, :]                      # (G, L) block-diagonal weights
        lin = jnp.dot(t, Wblk, preferred_element_type=jnp.float32) + b_row

    per = jnp.sin(lin) * W_row                    # EUP sin + VPU scale (periodic)
    # Aperiodic channel has W[0] folded into its weight/bias -> take `lin` directly.
    out_ref[...] = jnp.where(mask != 0.0, per, lin).astype(out_ref.dtype)


def time2vec(tau, w_ap, b_ap, w_p, b_p, W, *,
             block_bytes=4 * 1024 * 1024, out_dtype=jnp.float32):
    """tau: (B, S) float32. Returns (B, S, E) in `out_dtype` (default f32)."""
    B, S = tau.shape
    E = int(W.shape[0])
    N = B * S

    # ---- lane-group factor: pack G logical rows per physical row so G*E % 128 == 0 ----
    if E <= 128 and 128 % E == 0:
        G = 128 // E
        while G < 8:          # widen so the matmul contraction dim is a full sublane group
            G *= 2
    else:
        G = 1                 # TODO(synk): E not dividing 128 falls back to 25%-lane layout.
    L = G * E

    # ---- wrapper-side parameter packing (plain JAX glue, negligible) ----
    W32 = W.astype(jnp.float32)
    W0 = W32[0]
    # Fold the aperiodic output scale W[0] into its weight/bias; its W slot becomes 1
    # (masked out in the kernel anyway).
    w_full = jnp.concatenate([(w_ap.reshape(-1) * W0), w_p.reshape(-1)]).astype(jnp.float32)  # (E,)
    b_full = jnp.concatenate([(b_ap.reshape(-1) * W0), b_p.reshape(-1)]).astype(jnp.float32)  # (E,)
    W_full = jnp.concatenate([jnp.ones((1,), jnp.float32), W32[1:]])                          # (E,)
    mask = (jnp.arange(E) != 0).astype(jnp.float32)                                           # (E,)

    b_row = jnp.tile(b_full, G)                                     # (L,)
    W_row = jnp.tile(W_full, G)                                     # (L,)
    m_row = jnp.tile(mask, G)                                       # (L,)
    # Block-diagonal weight expansion: Wblk[g, g*E + e] = w_full[e]
    Wblk = (jnp.eye(G, dtype=jnp.float32)[:, :, None] * w_full[None, None, :]).reshape(G, L)

    n_prows = 3 + G
    n_prows_pad = _round_up(n_prows, 8)
    params = jnp.zeros((n_prows_pad, L), jnp.float32)
    params = params.at[0:G].set(Wblk)
    params = params.at[G].set(b_row)
    params = params.at[G + 1].set(W_row)
    params = params.at[G + 2].set(m_row)

    # ---- tau packing: (B, S) -> (Np, G), row-major so out.reshape(Np*G, E) is the answer ----
    tau_flat = tau.reshape(-1).astype(jnp.float32)
    Np = _cdiv(N, G)
    padded = (Np * G != N)
    if padded:
        tau_flat = jnp.pad(tau_flat, (0, Np * G - N))   # <= G-1 elements, tiny
    tau_pk = tau_flat.reshape(Np, G)

    # ---- tile sizing: ~block_bytes of f32 output per buffer, but keep >= ~8 grid steps ----
    tile_cap = max(8, block_bytes // (L * 4))
    tile_split = _round_up(_cdiv(Np, 8), 8)             # aim for >= ~8 steps when N is big
    tile_p = min(tile_cap, max(1024, tile_split))
    tile_p = min(tile_p, _round_up(Np, 8))
    tile_p = max(8, _round_up(tile_p, 8))
    grid = (_cdiv(Np, tile_p),)                          # ragged last block is masked by Pallas

    out = pl.pallas_call(
        _time2vec_kernel,
        out_shape=jax.ShapeDtypeStruct((Np, L), out_dtype),
        grid=grid,
        in_specs=[
            pl.BlockSpec((tile_p, G), lambda i: (i, 0)),           # streamed packed tau rows
            pl.BlockSpec((n_prows_pad, L), lambda i: (0, 0)),      # params: one DMA, VMEM-resident
        ],
        out_specs=pl.BlockSpec((tile_p, L), lambda i: (i, 0)),
        compiler_params=pltpu.CompilerParams(
            dimension_semantics=("parallel",)),
    )(tau_pk, params)

    out_flat = out.reshape(Np * G, E)    # row-major compatible: free
    if padded:
        out_flat = out_flat[:N]          # only when B*S % G != 0
    return out_flat.reshape(B, S, E)


def time2vec_ref(tau, w_ap, b_ap, w_p, b_p, W):
    """Pure-JAX reference mirroring the PyTorch forward."""
    t = tau[..., None]                                   # (B, S, 1)
    tau_ap = t * w_ap + b_ap                             # (B, S, 1)
    tau_p = jnp.sin(t * w_p[None, None, :] + b_p)        # (B, S, E-1)
    out = jnp.concatenate([tau_ap, tau_p], axis=-1)      # (B, S, E)
    return out * W


if __name__ == "__main__":
    key = jax.random.PRNGKey(0)
    B, S, E = 2, 8, 32   # batch, seq_len, time_emb_size

    k_tau, k_wap, k_bap, k_wp, k_bp, k_W = jax.random.split(key, 6)
    tau = jax.random.uniform(k_tau, (B, S), jnp.float32, 0.0, 10.0)

    # nn.Linear(1, 1): weight (1, 1), bias (1,)
    w_ap = jax.random.normal(k_wap, (1,), jnp.float32)
    b_ap = jax.random.normal(k_bap, (1,), jnp.float32)
    # nn.Linear(1, E-1): weight (E-1, 1), bias (E-1,)
    w_p = jax.random.normal(k_wp, (E - 1,), jnp.float32)
    b_p = jax.random.normal(k_bp, (E - 1,), jnp.float32)
    # W parameter: (E,)
    W = jax.random.normal(k_W, (E,), jnp.float32)

    # Case 1: small single-block shape (N=16 logical rows -> 2 packed rows).
    out = jax.block_until_ready(time2vec(tau, w_ap, b_ap, w_p, b_p, W))
    ref = time2vec_ref(tau, w_ap, b_ap, w_p, b_p, W)
    assert out.shape == (B, S, E)
    assert jnp.allclose(out, ref, atol=1e-4, rtol=1e-4), "mismatch vs reference (small)"

    # Case 2a: medium shape, default tile (single block, N=400 divisible by G).
    B2, S2 = 4, 100
    tau2 = jax.random.uniform(jax.random.PRNGKey(1), (B2, S2), jnp.float32, 0.0, 10.0)
    ref2 = time2vec_ref(tau2, w_ap, b_ap, w_p, b_p, W)
    out2a = jax.block_until_ready(time2vec(tau2, w_ap, b_ap, w_p, b_p, W))
    assert out2a.shape == (B2, S2, E)
    assert jnp.allclose(out2a, ref2, atol=1e-4, rtol=1e-4), "mismatch vs reference (default tile)"

    # Case 2b: force tiny tiles -> multi-step grid + ragged (masked) last block.
    out2b = jax.block_until_ready(
        time2vec(tau2, w_ap, b_ap, w_p, b_p, W, block_bytes=16 * 1024))
    assert jnp.allclose(out2b, ref2, atol=1e-4, rtol=1e-4), "mismatch vs reference (ragged grid)"

    # Case 3: N not divisible by the packing factor G (exercises the tiny tau pad path).
    B3, S3 = 3, 7
    tau3 = jax.random.uniform(jax.random.PRNGKey(2), (B3, S3), jnp.float32, 0.0, 10.0)
    out3 = jax.block_until_ready(time2vec(tau3, w_ap, b_ap, w_p, b_p, W))
    ref3 = time2vec_ref(tau3, w_ap, b_ap, w_p, b_p, W)
    assert out3.shape == (B3, S3, E)
    assert jnp.allclose(out3, ref3, atol=1e-4, rtol=1e-4), "mismatch vs reference (unaligned N)"

    print("KERNEL_OK")
</pallas_src>

<mosaic_0001>
module attributes {stable_mosaic.version = 11 : i64} {
  func.func @_time2vec_kernel(%arg0: i32, %arg1: memref<8x8xf32, #tpu.memory_space<vmem>>, %arg2: memref<16x256xf32, #tpu.memory_space<vmem>>, %arg3: memref<8x256xf32, #tpu.memory_space<vmem>>) attributes {dimension_semantics = [#tpu.dimension_semantics<parallel>], iteration_bounds = array<i64: 1>, scalar_prefetch = 0 : i64, scratch_operands = 0 : i64, tpu.core_type = #tpu.core_type<tc>, window_params = [{transform_indices = @transform_0, window_bounds = array<i64: 8, 8>}, {pipeline_mode = #tpu.pipeline_mode<synchronous>, transform_indices = @transform_1, window_bounds = array<i64: 16, 256>}, {transform_indices = @transform_2, window_bounds = array<i64: 8, 256>}]} {
    %c0 = arith.constant 0 : index
    %c0_0 = arith.constant 0 : index
    %0 = vector.load %arg1[%c0, %c0_0] : memref<8x8xf32, #tpu.memory_space<vmem>>, vector<8x8xf32>
    %c8 = arith.constant 8 : index
    %c0_1 = arith.constant 0 : index
    %1 = vector.load %arg2[%c8, %c0_1] : memref<16x256xf32, #tpu.memory_space<vmem>>, vector<1x256xf32>
    %c9 = arith.constant 9 : index
    %c0_2 = arith.constant 0 : index
    %2 = vector.load %arg2[%c9, %c0_2] : memref<16x256xf32, #tpu.memory_space<vmem>>, vector<1x256xf32>
    %c10 = arith.constant 10 : index
    %c0_3 = arith.constant 0 : index
    %3 = vector.load %arg2[%c10, %c0_3] : memref<16x256xf32, #tpu.memory_space<vmem>>, vector<1x256xf32>
    %c0_4 = arith.constant 0 : index
    %c0_5 = arith.constant 0 : index
    %4 = vector.load %arg2[%c0_4, %c0_5] : memref<16x256xf32, #tpu.memory_space<vmem>>, vector<8x256xf32>
    %cst = arith.constant dense<0.000000e+00> : vector<8x256xf32>
    %5 = tpu.matmul %0, %4, %cst {dimension_numbers = #tpu.dot_dimension_numbers<[1], [0], [0], [1], [0, 0, 1, 1], [], []>} : vector<8x8xf32>, vector<8x256xf32>, vector<8x256xf32> -> vector<8x256xf32>
    %6 = vector.broadcast %1 : vector<1x256xf32> to vector<8x256xf32>
    %7 = arith.addf %5, %6 : vector<8x256xf32>
    %8 = math.sin %7 : vector<8x256xf32>
    %9 = vector.broadcast %2 : vector<1x256xf32> to vector<8x256xf32>
    %10 = arith.mulf %8, %9 : vector<8x256xf32>
    %cst_6 = arith.constant 0.000000e+00 : f32
    %11 = vector.broadcast %cst_6 : f32 to vector<1x256xf32>
    %12 = arith.cmpf one, %3, %11 : vector<1x256xf32>
    %13 = vector.shape_cast %12 : vector<1x256xi1> to vector<1x256xi1>
    %14 = vector.broadcast %13 : vector<1x256xi1> to vector<8x256xi1>
    %15 = arith.select %14, %10, %7 : vector<8x256xi1>, vector<8x256xf32>
    %c0_7 = arith.constant 0 : index
    %c0_8 = arith.constant 0 : index
    %16 = vector.load %arg3[%c0_7, %c0_8] : memref<8x256xf32, #tpu.memory_space<vmem>>, vector<8x256xf32>
    tpu.vector_store %arg3[%c0_7, %c0_8], %15 {strides = array<i32>} : memref<8x256xf32, #tpu.memory_space<vmem>>, vector<8x256xf32>,
    return
  }
  func.func @transform_0(%arg0: i32) -> (i32, i32) {
    %c0_i32 = arith.constant 0 : i32
    %c0_i32_0 = arith.constant 0 : i32
    return %arg0, %c0_i32 : i32, i32
  }
  func.func @transform_1(%arg0: i32) -> (i32, i32) {
    %c0_i32 = arith.constant 0 : i32
    %c0_i32_0 = arith.constant 0 : i32
    %c0_i32_1 = arith.constant 0 : i32
    return %c0_i32, %c0_i32_0 : i32, i32
  }
  func.func @transform_2(%arg0: i32) -> (i32, i32) {
    %c0_i32 = arith.constant 0 : i32
    %c0_i32_0 = arith.constant 0 : i32
    return %arg0, %c0_i32 : i32, i32
  }
}

</mosaic_0001>

<llo_original>
// kernel: tpu_custom_call.1
$region0: #{tpu_custom_call.1}
  #allocation0 [shape = 'u32[]', space=smem, size = 0x4, offset = 0x4, fixed_abs, tag = 'smem constant byte address 0x4 - core index']
  #allocation1 [shape = 'u32[72,128]{1,0:T(1,128)}', space=vmem, size = 0x9000, scoped, tag = 'internal scratch']
  %s0 = inlined_call_operand.hbm [shape: f32[2,8], index: 0, kind: input, shape index: {}]
  %s1 = inlined_call_operand.hbm [shape: f32[16,256], index: 1, kind: input, shape index: {}]
  %s2 = inlined_call_operand.hbm [shape: f32[2,256], index: 2, kind: output, shape index: {}]
  %s3 = sld [smem:[#allocation0]]
  $region26: #{tpu_custom_call.1} parent=0
    _
  %s5 = ssub.s32 1, %s3
  %s6 = scalar_select 0, %s5, %s3
  $region1: #{tpu_custom_call.1} parent=0
    #allocation2 [shape = 'u8[4096]{0}', space=vmem, size = 0x1000, scoped, tag = 'input window, operand 0, single buffered']
    #allocation3 [shape = 's32[1]{0}', space=sflag, size = 0x4, scoped, tag = 'scoped memory for tpu_custom_call.1']
    #allocation4 [shape = 's32[1]{0}', space=sflag, size = 0x4, scoped, tag = 'scoped memory for tpu_custom_call.1']
    #allocation5 [shape = 'u8[16384]{0}', space=vmem, size = 0x4000, scoped, tag = 'input window, operand 1, single buffered']
    #allocation6 [shape = 's32[1]{0}', space=sflag, size = 0x4, scoped, tag = 'scoped memory for tpu_custom_call.1']
    #allocation7 [shape = 'u8[8192]{0}', space=vmem, size = 0x2000, scoped, tag = 'output window, operand 0, single buffered']
    %7 = vsyncpa [#allocation3], 0
    %8 = vsyncpa [#allocation6], 0
    %9 = vsyncpa [#allocation4], 0
    // Predicated region
    $region2: #{tpu_custom_call.1} parent=1 // pred_check
      _
    $region3: #{tpu_custom_call.1} parent=1 // pred_check_branch
      %11 = sbr.rel (0) target = $region5
    $region4: #{tpu_custom_call.1} parent=1 // pred_region
      %13 = vsyncadd [#allocation3], 96
      %s14 = sshll.u32 %s0, 4
      %s15 = int_to_ptr.hbm [resolvable:$true] %s14
      %s16 = sshll.u32 [#allocation2], 4
      %s17 = int_to_ptr.vmem [resolvable:$true] %s16
      %22 = dma.hbm_to_vmem [thread:$0]  %s15, 32, %s17, [#allocation3], 32, 32, 2
    $region5: #{tpu_custom_call.1} parent=1 // pred_fallthru
      _
    // Predicated region
    $region6: #{tpu_custom_call.1} parent=1 // pred_check
      _
    $region7: #{tpu_custom_call.1} parent=1 // pred_check_branch
      %24 = sbr.rel (0) target = $region9
    $region8: #{tpu_custom_call.1} parent=1 // pred_region
      %26 = vsyncadd [#allocation6], 0
      %s27 = sshll.u32 %s1, 4
      %s28 = int_to_ptr.hbm [resolvable:$true] %s27
      %s29 = sshll.u32 [#allocation5], 4
      %s30 = int_to_ptr.vmem [resolvable:$true] %s29
      %35 = dma.hbm_to_vmem [thread:$0]  %s28, 512, %s30, [#allocation6], 256, 256, 16
    $region9: #{tpu_custom_call.1} parent=1 // pred_fallthru
      _
    // Predicated region
    $region10: #{tpu_custom_call.1} parent=1 // pred_check
      _
    $region11: #{tpu_custom_call.1} parent=1 // pred_check_branch
      %37 = sbr.rel (0) target = $region13
    $region12: #{tpu_custom_call.1} parent=1 // pred_region
      %39 = dma.done [#allocation3], 128
    $region13: #{tpu_custom_call.1} parent=1 // pred_fallthru
      _
    // Predicated region
    $region14: #{tpu_custom_call.1} parent=1 // pred_check
      _
    $region15: #{tpu_custom_call.1} parent=1 // pred_check_branch
      %41 = sbr.rel (0) target = $region17
    $region16: #{tpu_custom_call.1} parent=1 // pred_region
      %43 = dma.done [#allocation6], 512
    $region17: #{tpu_custom_call.1} parent=1 // pred_fallthru
      _
    %v44 = vld [vmem:[#allocation2] sm:$0xff]
    %s45 = scalar_lea.vmem [#allocation5], 16
    %v46 = vld [vmem:[%s45] ss:$8 sm:$0x3]
    %s47 = scalar_lea.vmem [#allocation5], 17
    %v48 = vld [vmem:[%s47] ss:$8 sm:$0x3]
    %s49 = scalar_lea.vmem [#allocation5], 18
    %v50 = vld [vmem:[%s49] ss:$8 sm:$0x3]
    %v51 = vld [vmem:[#allocation5] sm:$0xff]
    %v52 = vld [vmem:[#allocation5 + $0x8] sm:$0xff]
    %v54 = vperm.slane %v46, 0
    %v55 = vperm.slane %v46, 1
    %vm58 = vcmask 64512
    %v60 = vsel %vm58, %v44, 0
    %62 = vmatpush.msra.mxu0 0.0
    %63 = vmatpush.msra.mxu0 0.0
    %64 = vmatpush.msra.mxu0 0.0
    %65 = vmatpush.msra.mxu0 0.0
    %66 = vmatpush.msra.mxu0 0.0
    %67 = vmatpush.msra.mxu0 0.0
    %68 = vmatpush.msra.mxu0 0.0
    %69 = vmatpush.msra.mxu0 0.0
    %70 = vmatpush.msra.mxu0 0.0
    %71 = vmatpush.msra.mxu0 0.0
    %72 = vmatpush.msra.mxu0 0.0
    %73 = vmatpush.msra.mxu0 0.0
    %74 = vmatpush.msra.mxu0 0.0
    %75 = vmatpush.msra.mxu0 0.0
    %76 = vmatpush.msra.mxu0 0.0
    %77 = vmatpush.msra.mxu0 %v51
    %78 = vmatmul.f32.gmra.mxu0 %v60
    %v79 = vpop.f32.mrf.mxu0
    %v80 = vadd.f32 %v54, %v79
    %81 = vdwg.mxu0
    %82 = vmatpush.msra.mxu0 0.0
    %83 = vmatpush.msra.mxu0 0.0
    %84 = vmatpush.msra.mxu0 0.0
    %85 = vmatpush.msra.mxu0 0.0
    %86 = vmatpush.msra.mxu0 0.0
    %87 = vmatpush.msra.mxu0 0.0
    %88 = vmatpush.msra.mxu0 0.0
    %89 = vmatpush.msra.mxu0 0.0
    %90 = vmatpush.msra.mxu0 0.0
    %91 = vmatpush.msra.mxu0 0.0
    %92 = vmatpush.msra.mxu0 0.0
    %93 = vmatpush.msra.mxu0 0.0
    %94 = vmatpush.msra.mxu0 0.0
    %95 = vmatpush.msra.mxu0 0.0
    %96 = vmatpush.msra.mxu0 0.0
    %97 = vmatpush.msra.mxu0 %v52
    %98 = vmatmul.f32.gmra.mxu0 %v60
    %v99 = vpop.f32.mrf.mxu0
    %v100 = vadd.f32 %v55, %v99
    %101 = vdwg.mxu0
    %v102 = vand.u32 2147483647, %v80
    %vm103 = vcmp.le.f32.partialorder %v102, 0.7853982
    %vm104 = vcmp.lt.s32.totalorder %v80, 0
    %v105 = vand.u32 %v80, 2139095040
    %v106 = vshrl.u32 %v105, 23
    %v107 = vsub.s32 %v106, 127
    %v108 = vand.u32 2147483647, %v80
    %v109 = vand.u32 %v108, 8388607
    %v110 = vor.u32 %v109, 8388608
    %v111 = vsub.s32 0, %v110
    %v112 = vadd.s32 %v107, 1
    %vm113 = vcmp.gt.s32.totalorder %v112, 0
    %v114 = vsel %vm113, %v112, 0
    %v115 = vshrl.u32 %v114, 5
    %v116 = vand.u32 %v114, 31
    %v117 = vsub.s32 32, %v116
    %v118 = vshrl.u32 683565275, %v117
    %v119 = vshll.u32 683565275, %v116
    %v120 = vshrl.u32 2475754826, %v117
    %v121 = vor.u32 %v119, %v120
    %v122 = vshll.u32 2475754826, %v116
    %v123 = vshrl.u32 2131351028, %v117
    %v124 = vor.u32 %v122, %v123
    %v125 = vshll.u32 2131351028, %v116
    %v126 = vshrl.u32 2102212464, %v117
    %v127 = vor.u32 %v125, %v126
    %v128 = vshll.u32 2102212464, %v116
    %v129 = vshrl.u32 920167782, %v117
    %v130 = vor.u32 %v128, %v129
    %v131 = vshll.u32 920167782, %v116
    %v132 = vshrl.u32 1326507024, %v117
    %v133 = vor.u32 %v131, %v132
    %vm134 = vcmp.lt.s32.totalorder %v115, 1
    %vm135 = vcmp.lt.s32.totalorder %v115, 2
    %vm136 = vcmp.lt.s32.totalorder %v115, 3
    %vm137 = vcmp.lt.s32.totalorder %v115, 4
    %v138 = vsel %vm134, %v118, %v121
    %v139 = vsel %vm137, %v127, 2102212464
    %v140 = vsel %vm136, %v124, %v139
    %v141 = vsel %vm135, %v138, %v140
    %v142 = vsel %vm134, %v121, %v124
    %v143 = vsel %vm137, %v130, 920167782
    %v144 = vsel %vm136, %v127, %v143
    %v145 = vsel %vm135, %v142, %v144
    %v146 = vsel %vm134, %v124, %v127
    %v147 = vsel %vm137, %v133, 1326507024
    %v148 = vsel %vm136, %v130, %v147
    %v149 = vsel %vm135, %v146, %v148
    %v150 = vshll.u32 %v110, 8
    %v151 = vand.u32 %v150, 65535
    %v152 = vshrl.u32 %v150, 16
    %v153 = vand.u32 %v149, 65535
    %v154 = vshrl.u32 %v149, 16
    %v155 = vmul.u32 %v151, %v153
    %v156 = vmul.u32 %v151, %v154
    %v157 = vmul.u32 %v152, %v153
    %v158 = vmul.u32 %v152, %v154
    %v159 = vshll.u32 %v156, 16
    %v160 = vshrl.u32 %v156, 16
    %v161 = vshll.u32 %v157, 16
    %v162 = vshrl.u32 %v157, 16
    %vm163 = vc.u32 %v155, %v159
    %v164 = vsel %vm163, 1, 0
    %v165 = vadd.s32 %v155, %v159
    %v166 = vadd.s32 %v158, %v164
    %vm167 = vc.u32 %v165, %v161
    %v168 = vsel %vm167, 1, 0
    %v169 = vadd.s32 %v165, %v161
    %v170 = vadd.s32 %v166, %v168
    %v171 = vadd.s32 %v170, %v160
    %v172 = vadd.s32 %v171, %v162
    %v173 = vand.u32 %v150, 65535
    %v174 = vshrl.u32 %v150, 16
    %v175 = vand.u32 %v145, 65535
    %v176 = vshrl.u32 %v145, 16
    %v177 = vmul.u32 %v173, %v175
    %v178 = vmul.u32 %v173, %v176
    %v179 = vmul.u32 %v174, %v175
    %v180 = vmul.u32 %v174, %v176
    %v181 = vshll.u32 %v178, 16
    %v182 = vshrl.u32 %v178, 16
    %v183 = vshll.u32 %v179, 16
    %v184 = vshrl.u32 %v179, 16
    %vm185 = vc.u32 %v177, %v181
    %v186 = vsel %vm185, 1, 0
    %v187 = vadd.s32 %v177, %v181
    %v188 = vadd.s32 %v180, %v186
    %vm189 = vc.u32 %v187, %v183
    %v190 = vsel %vm189, 1, 0
    %v191 = vadd.s32 %v187, %v183
    %v192 = vadd.s32 %v188, %v190
    %v193 = vadd.s32 %v192, %v182
    %v194 = vadd.s32 %v193, %v184
    %v195 = vmul.u32 %v150, %v141
    %v196 = vadd.s32 %v172, %v191
    %vm197 = vc.u32 %v172, %v191
    %v198 = vadd.s32 %v194, 1
    %v199 = vsel %vm197, %v198, %v194
    %v200 = vadd.s32 %v195, %v199
    %v201 = vadd.s32 %v200, 536870912
    %v202 = vshrl.u32 %v201, 30
    %v203 = vshll.u32 %v202, 30
    %v204 = vsub.s32 %v200, %v203
    %vm205 = vcmp.lt.s32.totalorder %v204, 0
    %v206 = vsub.s32 0, %v204
    %v207 = vsel %vm205, %v206, %v204
    %v208 = vclz %v207
    %v209 = vsub.s32 %v208, 2
    %vm210 = vcmp.gt.s32.totalorder 0, %v209
    %v211 = vsel %vm210, 0, %v209
    %v212 = vsub.s32 32, %v211
    %v213 = vshll.u32 %v204, %v211
    %v214 = vshrl.u32 %v196, %v212
    %v215 = vor.u32 %v213, %v214
    %v216 = vsub.s32 4294967266, %v211
    %v217 = vadd.s32 %v216, 127
    %v218 = vshll.u32 %v217, 23
    %v219 = vor.u32 4788187, %v218
    %v220 = vand.u32 2147483647, %v219
    %v222 = vcvt.s32.f32 %v215
    %v223 = vmul.f32 %v222, %v220
    %v224 = vxor.u32 %v223, 2147483648
    %v225 = vsel %vm104, %v224, %v223
    %v226 = vsub.s32 4, %v202
    %v227 = vsel %vm104, %v226, %v202
    %v228 = vsel %vm103, %v80, %v225
    %v229 = vsel %vm103, 0, %v227
    %v230 = vmul.f32 %v228, %v228
    %v231 = vmul.f32 %v230, -0.001358992
    %v232 = vadd.f32 %v231, 0.041655596
    %v233 = vmul.f32 %v230, %v232
    %v234 = vadd.f32 %v233, -0.4999988
    %v235 = vmul.f32 %v230, %v234
    %v236 = vadd.f32 1.0, %v235
    %v237 = vmul.f32 %v228, %v228
    %v238 = vmul.f32 %v237, -0.00019511016
    %v239 = vadd.f32 %v238, 0.008332121
    %v240 = vmul.f32 %v237, %v239
    %v241 = vadd.f32 %v240, -0.16666654
    %v242 = vmul.f32 %v237, %v241
    %v243 = vadd.f32 %v242, 1.0
    %v244 = vmul.f32 %v243, %v228
    %vm245 = vweird.f32 %v80
    %v246 = vadd.s32 %v229, 3
    %v247 = vand.u32 %v246, 3
    %vm248 = vcmp.lt.s32.totalorder %v247, 2
    %vm249 = vcmp.eq.s32.totalorder %v247, 0
    %v250 = vxor.u32 %v244, 2147483648
    %v251 = vsel %vm249, %v236, %v250
    %vm252 = vcmp.eq.s32.totalorder %v247, 2
    %v253 = vxor.u32 %v236, 2147483648
    %v254 = vsel %vm252, %v253, %v244
    %v255 = vsel %vm248, %v251, %v254
    %v256 = vsel %vm245, nan, %v255
    %v257 = vand.u32 2147483647, %v100
    %vm258 = vcmp.le.f32.partialorder %v257, 0.7853982
    %vm259 = vcmp.lt.s32.totalorder %v100, 0
    %v260 = vand.u32 %v100, 2139095040
    %v261 = vshrl.u32 %v260, 23
    %v262 = vsub.s32 %v261, 127
    %v263 = vand.u32 2147483647, %v100
    %v264 = vand.u32 %v263, 8388607
    %v265 = vor.u32 %v264, 8388608
    %v266 = vsub.s32 0, %v265
    %v267 = vadd.s32 %v262, 1
    %vm268 = vcmp.gt.s32.totalorder %v267, 0
    %v269 = vsel %vm268, %v267, 0
    %v270 = vshrl.u32 %v269, 5
    %v271 = vand.u32 %v269, 31
    %v272 = vsub.s32 32, %v271
    %v273 = vshrl.u32 683565275, %v272
    %v274 = vshll.u32 683565275, %v271
    %v275 = vshrl.u32 2475754826, %v272
    %v276 = vor.u32 %v274, %v275
    %v277 = vshll.u32 2475754826, %v271
    %v278 = vshrl.u32 2131351028, %v272
    %v279 = vor.u32 %v277, %v278
    %v280 = vshll.u32 2131351028, %v271
    %v281 = vshrl.u32 2102212464, %v272
    %v282 = vor.u32 %v280, %v281
    %v283 = vshll.u32 2102212464, %v271
    %v284 = vshrl.u32 920167782, %v272
    %v285 = vor.u32 %v283, %v284
    %v286 = vshll.u32 920167782, %v271
    %v287 = vshrl.u32 1326507024, %v272
    %v288 = vor.u32 %v286, %v287
    %vm289 = vcmp.lt.s32.totalorder %v270, 1
    %vm290 = vcmp.lt.s32.totalorder %v270, 2
    %vm291 = vcmp.lt.s32.totalorder %v270, 3
    %vm292 = vcmp.lt.s32.totalorder %v270, 4
    %v293 = vsel %vm289, %v273, %v276
    %v294 = vsel %vm292, %v282, 2102212464
    %v295 = vsel %vm291, %v279, %v294
    %v296 = vsel %vm290, %v293, %v295
    %v297 = vsel %vm289, %v276, %v279
    %v298 = vsel %vm292, %v285, 920167782
    %v299 = vsel %vm291, %v282, %v298
    %v300 = vsel %vm290, %v297, %v299
    %v301 = vsel %vm289, %v279, %v282
    %v302 = vsel %vm292, %v288, 1326507024
    %v303 = vsel %vm291, %v285, %v302
    %v304 = vsel %vm290, %v301, %v303
    %v305 = vshll.u32 %v265, 8
    %v306 = vand.u32 %v305, 65535
    %v307 = vshrl.u32 %v305, 16
    %v308 = vand.u32 %v304, 65535
    %v309 = vshrl.u32 %v304, 16
    %v310 = vmul.u32 %v306, %v308
    %v311 = vmul.u32 %v306, %v309
    %v312 = vmul.u32 %v307, %v308
    %v313 = vmul.u32 %v307, %v309
    %v314 = vshll.u32 %v311, 16
    %v315 = vshrl.u32 %v311, 16
    %v316 = vshll.u32 %v312, 16
    %v317 = vshrl.u32 %v312, 16
    %vm318 = vc.u32 %v310, %v314
    %v319 = vsel %vm318, 1, 0
    %v320 = vadd.s32 %v310, %v314
    %v321 = vadd.s32 %v313, %v319
    %vm322 = vc.u32 %v320, %v316
    %v323 = vsel %vm322, 1, 0
    %v324 = vadd.s32 %v320, %v316
    %v325 = vadd.s32 %v321, %v323
    %v326 = vadd.s32 %v325, %v315
    %v327 = vadd.s32 %v326, %v317
    %v328 = vand.u32 %v305, 65535
    %v329 = vshrl.u32 %v305, 16
    %v330 = vand.u32 %v300, 65535
    %v331 = vshrl.u32 %v300, 16
    %v332 = vmul.u32 %v328, %v330
    %v333 = vmul.u32 %v328, %v331
    %v334 = vmul.u32 %v329, %v330
    %v335 = vmul.u32 %v329, %v331
    %v336 = vshll.u32 %v333, 16
    %v337 = vshrl.u32 %v333, 16
    %v338 = vshll.u32 %v334, 16
    %v339 = vshrl.u32 %v334, 16
    %vm340 = vc.u32 %v332, %v336
    %v341 = vsel %vm340, 1, 0
    %v342 = vadd.s32 %v332, %v336
    %v343 = vadd.s32 %v335, %v341
    %vm344 = vc.u32 %v342, %v338
    %v345 = vsel %vm344, 1, 0
    %v346 = vadd.s32 %v342, %v338
    %v347 = vadd.s32 %v343, %v345
    %v348 = vadd.s32 %v347, %v337
    %v349 = vadd.s32 %v348, %v339
    %v350 = vmul.u32 %v305, %v296
    %v351 = vadd.s32 %v327, %v346
    %vm352 = vc.u32 %v327, %v346
    %v353 = vadd.s32 %v349, 1
    %v354 = vsel %vm352, %v353, %v349
    %v355 = vadd.s32 %v350, %v354
    %v356 = vadd.s32 %v355, 536870912
    %v357 = vshrl.u32 %v356, 30
    %v358 = vshll.u32 %v357, 30
    %v359 = vsub.s32 %v355, %v358
    %vm360 = vcmp.lt.s32.totalorder %v359, 0
    %v361 = vsub.s32 0, %v359
    %v362 = vsel %vm360, %v361, %v359
    %v363 = vclz %v362
    %v364 = vsub.s32 %v363, 2
    %vm365 = vcmp.gt.s32.totalorder 0, %v364
    %v366 = vsel %vm365, 0, %v364
    %v367 = vsub.s32 32, %v366
    %v368 = vshll.u32 %v359, %v366
    %v369 = vshrl.u32 %v351, %v367
    %v370 = vor.u32 %v368, %v369
    %v371 = vsub.s32 4294967266, %v366
    %v372 = vadd.s32 %v371, 127
    %v373 = vshll.u32 %v372, 23
    %v374 = vor.u32 4788187, %v373
    %v375 = vand.u32 2147483647, %v374
    %v377 = vcvt.s32.f32 %v370
    %v378 = vmul.f32 %v377, %v375
    %v379 = vxor.u32 %v378, 2147483648
    %v380 = vsel %vm259, %v379, %v378
    %v381 = vsub.s32 4, %v357
    %v382 = vsel %vm259, %v381, %v357
    %v383 = vsel %vm258, %v100, %v380
    %v384 = vsel %vm258, 0, %v382
    %v385 = vmul.f32 %v383, %v383
    %v386 = vmul.f32 %v385, -0.001358992
    %v387 = vadd.f32 %v386, 0.041655596
    %v388 = vmul.f32 %v385, %v387
    %v389 = vadd.f32 %v388, -0.4999988
    %v390 = vmul.f32 %v385, %v389
    %v391 = vadd.f32 1.0, %v390
    %v392 = vmul.f32 %v383, %v383
    %v393 = vmul.f32 %v392, -0.00019511016
    %v394 = vadd.f32 %v393, 0.008332121
    %v395 = vmul.f32 %v392, %v394
    %v396 = vadd.f32 %v395, -0.16666654
    %v397 = vmul.f32 %v392, %v396
    %v398 = vadd.f32 %v397, 1.0
    %v399 = vmul.f32 %v398, %v383
    %vm400 = vweird.f32 %v100
    %v401 = vadd.s32 %v384, 3
    %v402 = vand.u32 %v401, 3
    %vm403 = vcmp.lt.s32.totalorder %v402, 2
    %vm404 = vcmp.eq.s32.totalorder %v402, 0
    %v405 = vxor.u32 %v399, 2147483648
    %v406 = vsel %vm404, %v391, %v405
    %vm407 = vcmp.eq.s32.totalorder %v402, 2
    %v408 = vxor.u32 %v391, 2147483648
    %v409 = vsel %vm407, %v408, %v399
    %v410 = vsel %vm403, %v406, %v409
    %v411 = vsel %vm400, nan, %v410
    %v413 = vperm.slane %v48, 0
    %v414 = vperm.slane %v48, 1
    %v417 = vmul.f32 %v256, %v413
    %v418 = vmul.f32 %v411, %v414
    %vm419 = vcmp.ne.f32.partialorder %v50, 0.0
    %v420 = vsel %vm419, 1, 0
    %v421 = vperm.slane %v420, 0
    %v422 = vperm.slane %v420, 1
    %vm423 = vcmp.eq.s32.totalorder %v421, 1
    %vm424 = vcmp.eq.s32.totalorder %v422, 1
    %v425 = vsel %vm423, %v417, %v80
    %v426 = vsel %vm424, %v418, %v100
    %v429 = vrot.slane %v426, 6
    %vm430 = vcmask 1041408
    %v431 = vsel %vm430, %v425, %v429
    %vm432 = vcmask 1043458
    %v433 = vsel %vm432, %v425, %v429
    %v434 = vrot.slane %v433, 2
    %vm435 = vcmask 1045508
    %v436 = vsel %vm435, %v425, %v429
    %v437 = vrot.slane %v436, 4
    %vm438 = vcmask 1045504
    %v439 = vsel %vm438, %v429, %v425
    %v440 = vrot.slane %v439, 6
    %445 = vst [vmem:[#allocation7] sm:$0xf] %v431
    %446 = vst [vmem:[#allocation7 + $0x4] sm:$0xf] %v434
    %447 = vst [vmem:[#allocation7 + $0x8] sm:$0xf] %v437
    %448 = vst [vmem:[#allocation7 + $0xc] sm:$0xf] %v440
    // Predicated region
    $region18: #{tpu_custom_call.1} parent=1 // pred_check
      _
    $region19: #{tpu_custom_call.1} parent=1 // pred_check_branch
      %450 = sbr.rel (0) target = $region21
    $region20: #{tpu_custom_call.1} parent=1 // pred_region
      %452 = vsyncadd [#allocation4], 192
      %s453 = sshll.u32 [#allocation7], 4
      %s454 = int_to_ptr.vmem [resolvable:$true] %s453
      %s455 = sshll.u32 %s2, 4
      %s456 = int_to_ptr.hbm [resolvable:$true] %s455
      %461 = dma.vmem_to_hbm [thread:$0]  %s454, 64, %s456, [#allocation4], 64, 64, 4
    $region21: #{tpu_custom_call.1} parent=1 // pred_fallthru
      _
    // Predicated region
    $region22: #{tpu_custom_call.1} parent=1 // pred_check
      _
    $region23: #{tpu_custom_call.1} parent=1 // pred_check_branch
      %463 = sbr.rel (0) target = $region25
    $region24: #{tpu_custom_call.1} parent=1 // pred_region
      %465 = dma.done [#allocation4], 256
    $region25: #{tpu_custom_call.1} parent=1 // pred_fallthru
      _
    %466 = vsyncpa [#allocation3], 1
    %467 = vsyncpa [#allocation6], 1
    %468 = vsyncpa [#allocation4], 1

</llo_original>
